<compile_context>
chip_gen: v7x
topology: tpu7x:2x2x1
jax: 0.10.0
libtpu: 0.0.40
codegen_flags: <defaults>
</compile_context>

<pallas_src>
import functools

import jax
import jax.numpy as jnp
from jax import lax
from jax.experimental import pallas as pl
from jax.experimental.pallas import tpu as pltpu


_LANE = 128
_SMALL_TOTAL = 64 * 1024                # below this, XLA fusion beats a kernel launch
_VMEM_LIMIT = 32 * 1024 * 1024          # safe scoped-VMEM request on v5e/v6e/v7x
_COPY_BLOCK_BYTES = 2 * 1024 * 1024     # 2 in + 2 out buffers = 8 MiB  (v5e-safe)
_LOSS_BLOCK_BYTES = 4 * 1024 * 1024     # only the input is tiled: 2 x 4 MiB buffers
_NUM_SLICES = 2                         # row-range split for v7x's 2 TensorCores


# ---------------------------------------------------------------------------
# Free (metadata-only) 2-D views — no jnp.pad, no output slice.
# ---------------------------------------------------------------------------
def _free_2d_view(x: jax.Array) -> jax.Array:
    """Lane-dense 2-D view of x obtained purely by reshape (never padded)."""
    total = x.size
    for cols in (2048, 1024, 512, 256, 128):
        if total % cols == 0:
            return x.reshape(total // cols, cols)
    # Ragged total: keep the natural trailing dim (full-dim blocks stay legal).
    if x.ndim >= 2:
        return x.reshape(-1, x.shape[-1])
    return x.reshape(1, total)


def _pick_block_rows(rows: int, cols: int, block_bytes: int, itemsize: int) -> int:
    """Largest legal block-row count targeting ~block_bytes per input block."""
    target = max(1, block_bytes // (cols * itemsize))
    if target >= rows:
        return rows                          # full-dim block: always legal
    return max(8, (target // 8) * 8)         # sublane multiple of 8: always legal


# ---------------------------------------------------------------------------
# forward: BaseModel.forward(*args) is `...` -> identity / pass-through.
# ---------------------------------------------------------------------------
def base_model_forward(x: jax.Array) -> jax.Array:
    """Abstract forward == identity.  Zero compute, zero HBM traffic."""
    # TODO(synk): forward is abstract in the PyTorch module; subclasses define
    #             the real computation.  Identity is the only faithful choice.
    return x


def _copy_kernel(x_ref, o_ref):
    o_ref[...] = x_ref[...]


def base_model_forward_pallas(x: jax.Array, *, block_bytes: int = _COPY_BLOCK_BYTES):
    """Optional datapath-exercising pass-through (HBM->VMEM->HBM copy).

    Lane-dense free reshape, cdiv grid (ragged tail writes are dropped by the
    hardware-masked boundary block), double-buffered, 'parallel' so v7x can
    shard the stream over both TensorCores.  Prefer `base_model_forward`
    (free) in real use.
    """
    if x.size == 0:
        return x
    x2d = _free_2d_view(x)
    rows, cols = x2d.shape
    br = _pick_block_rows(rows, cols, block_bytes, x2d.dtype.itemsize)
    grid = (pl.cdiv(rows, br),)

    y2d = pl.pallas_call(
        _copy_kernel,
        out_shape=jax.ShapeDtypeStruct((rows, cols), x2d.dtype),
        grid=grid,
        in_specs=[pl.BlockSpec((br, cols), lambda i: (i, 0))],
        out_specs=pl.BlockSpec((br, cols), lambda i: (i, 0)),
        compiler_params=pltpu.CompilerParams(
            dimension_semantics=("parallel",),
            vmem_limit_bytes=_VMEM_LIMIT,
        ),
    )(x2d)

    return y2d.reshape(x.shape)   # exact-size view back: no slice, no copy


# ---------------------------------------------------------------------------
# Fused loss reductions: read x from HBM exactly once, produce both moments.
# ---------------------------------------------------------------------------
def _moments_kernel(x_ref, ss_ref, sa_ref, acc_ss, acc_sa, *, rows, sub):
    s = pl.program_id(0)                 # parallel slice id (megacore split)
    j = pl.program_id(1)                 # sequential block id within the slice
    nj = pl.num_programs(1)

    @pl.when(j == 0)
    def _init():
        acc_ss[...] = jnp.zeros_like(acc_ss)
        acc_sa[...] = jnp.zeros_like(acc_sa)

    xv = x_ref[...].astype(jnp.float32)          # (br, cols)
    br, cols = xv.shape

    # In-kernel ragged-tail mask: global (unclamped) row id vs. static row count.
    row0 = (s * nj + j) * br
    rid = row0 + lax.broadcasted_iota(jnp.int32, (br, cols), 0)
    valid = rid < rows
    sq = jnp.where(valid, xv * xv, 0.0)
    ab = jnp.where(valid, jnp.abs(xv), 0.0)

    # VPU-only partial accumulation into a (sub, cols) vreg-shaped accumulator;
    # the cross-lane/sublane reduce to a scalar is deferred to the finalize.
    if br == sub:
        ss_part, sa_part = sq, ab
    else:
        ss_part = sq.reshape(br // sub, sub, cols).sum(axis=0)
        sa_part = ab.reshape(br // sub, sub, cols).sum(axis=0)
    acc_ss[...] += ss_part
    acc_sa[...] += sa_part

    @pl.when(j == nj - 1)
    def _fin():
        ss_ref[...] = jnp.broadcast_to(jnp.sum(acc_ss[...]), ss_ref.shape)
        sa_ref[...] = jnp.broadcast_to(jnp.sum(acc_sa[...]), sa_ref.shape)


def losses(x: jax.Array, *, block_bytes: int = _LOSS_BLOCK_BYTES):
    """Returns (mean(x^2), mean(|x|)) with a single HBM read of x.

    Callers that need both losses should call this once instead of calling
    train_loss and val_loss separately (which would stream x twice).
    """
    total = x.size
    if total < _SMALL_TOTAL:
        # Single-tile grids are pure launch overhead; plain XLA is cheaper.
        xf = x.astype(jnp.float32)
        return jnp.mean(xf * xf), jnp.mean(jnp.abs(xf))

    x2d = _free_2d_view(x)
    rows, cols = x2d.shape
    br = _pick_block_rows(rows, cols, block_bytes, x2d.dtype.itemsize)
    nb = pl.cdiv(rows, br)                       # real blocks
    num_slices = min(_NUM_SLICES, nb)            # v7x: one row-range per TC
    bps = pl.cdiv(nb, num_slices)                # blocks per slice
    sub = 8 if br % 8 == 0 else br               # accumulator sublane depth

    kernel = functools.partial(_moments_kernel, rows=rows, sub=sub)

    ss, sa = pl.pallas_call(
        kernel,
        out_shape=(
            jax.ShapeDtypeStruct((num_slices, 8, _LANE), jnp.float32),
            jax.ShapeDtypeStruct((num_slices, 8, _LANE), jnp.float32),
        ),
        grid=(num_slices, bps),
        in_specs=[
            # Clamp overshoot blocks (odd nb) to the last real block; their
            # contribution is zeroed by the in-kernel row mask.
            pl.BlockSpec((br, cols),
                         lambda s, j: (jnp.minimum(s * bps + j, nb - 1), 0)),
        ],
        out_specs=(
            pl.BlockSpec((1, 8, _LANE), lambda s, j: (s, 0, 0)),
            pl.BlockSpec((1, 8, _LANE), lambda s, j: (s, 0, 0)),
        ),
        scratch_shapes=[
            pltpu.VMEM((sub, cols), jnp.float32),
            pltpu.VMEM((sub, cols), jnp.float32),
        ],
        compiler_params=pltpu.CompilerParams(
            # outer axis: independent row ranges (sharded across TCs on v7x);
            # inner axis: reduction carried in the VMEM accumulators.
            dimension_semantics=("parallel", "arbitrary"),
            vmem_limit_bytes=_VMEM_LIMIT,
        ),
    )(x2d)

    inv_n = 1.0 / float(total)
    ss_sum = jnp.sum(ss[:, 0, 0])                # combine per-slice partials
    sa_sum = jnp.sum(sa[:, 0, 0])
    return ss_sum * inv_n, sa_sum * inv_n


# train_loss / val_loss are @abstractmethod in the PyTorch module; these are
# simple self-contained stand-ins (not part of the abstract contract).
# TODO(synk): train_loss / val_loss are @abstractmethod — no defined semantics.
def train_loss(x: jax.Array) -> jax.Array:
    mean_sq, _ = losses(x)
    return mean_sq                       # == mean(forward(x)**2), forward = id


def val_loss(x: jax.Array) -> jax.Array:
    _, mean_abs = losses(x)
    return mean_abs                      # == mean(|forward(x)|), forward = id


if __name__ == "__main__":
    key = jax.random.PRNGKey(0)
    k1, k2 = jax.random.split(key)

    # Small NCHW input consistent with a generic vision-style BaseModel subclass.
    x_small = jax.random.normal(k1, (2, 4, 16, 16), dtype=jnp.float32)
    # Larger, deliberately ragged input (86400 elems): exercises multi-block
    # grids, the megacore slice split, clamped overshoot blocks and in-kernel
    # tail masking, while staying tiny (~340 KiB).
    x_big = jax.random.normal(k2, (3, 4, 72, 100), dtype=jnp.float32)

    # Abstract forward: identity, no kernel, no HBM traffic.
    y_fast = base_model_forward(x_small)
    assert y_fast.shape == x_small.shape and y_fast.dtype == x_small.dtype

    # Pallas datapath copy (lane-dense, no pad/slice, ragged tail handled by
    # the boundary block).
    y_small = jax.block_until_ready(base_model_forward_pallas(x_small))
    assert bool(jnp.array_equal(y_small, x_small))
    y_big = jax.block_until_ready(
        base_model_forward_pallas(x_big, block_bytes=64 * 1024))  # multi-block + ragged
    assert bool(jnp.array_equal(y_big, x_big))

    # Fused losses: one pallas_call -> both moments, single HBM read of x.
    tl_big, vl_big = losses(x_big)                               # single full-dim block
    tl_big2, vl_big2 = losses(x_big, block_bytes=128 * 1024)     # both slices + overshoot
    jax.block_until_ready((tl_big, vl_big, tl_big2, vl_big2))
    ref_sq = jnp.mean(x_big.astype(jnp.float32) ** 2)
    ref_ab = jnp.mean(jnp.abs(x_big.astype(jnp.float32)))
    for got, ref in ((tl_big, ref_sq), (vl_big, ref_ab),
                     (tl_big2, ref_sq), (vl_big2, ref_ab)):
        assert bool(jnp.allclose(got, ref, rtol=1e-4, atol=1e-6)), (got, ref)

    # Tiny input short-circuits to plain XLA (no kernel-launch overhead).
    tl_s = jax.block_until_ready(train_loss(x_small))
    vl_s = jax.block_until_ready(val_loss(x_small))
    assert bool(jnp.allclose(tl_s, jnp.mean(x_small * x_small), rtol=1e-5, atol=1e-6))
    assert bool(jnp.allclose(vl_s, jnp.mean(jnp.abs(x_small)), rtol=1e-5, atol=1e-6))

    print("KERNEL_OK")
</pallas_src>

<mosaic_0001>
module attributes {stable_mosaic.version = 11 : i64} {
  func.func @_copy_kernel(%arg0: i32, %arg1: memref<1x2048xf32, #tpu.memory_space<vmem>>, %arg2: memref<1x2048xf32, #tpu.memory_space<vmem>>) attributes {dimension_semantics = [#tpu.dimension_semantics<parallel>], iteration_bounds = array<i64: 1>, scalar_prefetch = 0 : i64, scratch_operands = 0 : i64, tpu.core_type = #tpu.core_type<tc>, window_params = [{transform_indices = @transform_0, window_bounds = array<i64: 1, 2048>}, {transform_indices = @transform_1, window_bounds = array<i64: 1, 2048>}]} {
    %c0 = arith.constant 0 : index
    %c0_0 = arith.constant 0 : index
    %0 = vector.load %arg1[%c0, %c0_0] : memref<1x2048xf32, #tpu.memory_space<vmem>>, vector<1x2048xf32>
    %c0_1 = arith.constant 0 : index
    %c0_2 = arith.constant 0 : index
    %1 = vector.load %arg2[%c0_1, %c0_2] : memref<1x2048xf32, #tpu.memory_space<vmem>>, vector<1x2048xf32>
    tpu.vector_store %arg2[%c0_1, %c0_2], %0 {strides = array<i32>} : memref<1x2048xf32, #tpu.memory_space<vmem>>, vector<1x2048xf32>,
    return
  }
  func.func @transform_0(%arg0: i32) -> (i32, i32) {
    %c0_i32 = arith.constant 0 : i32
    %c0_i32_0 = arith.constant 0 : i32
    return %arg0, %c0_i32 : i32, i32
  }
  func.func @transform_1(%arg0: i32) -> (i32, i32) {
    %c0_i32 = arith.constant 0 : i32
    %c0_i32_0 = arith.constant 0 : i32
    return %arg0, %c0_i32 : i32, i32
  }
}

</mosaic_0001>

<llo_original>
// kernel: tpu_custom_call.1
$region0: #{tpu_custom_call.1}
  #allocation0 [shape = 'u32[]', space=smem, size = 0x4, offset = 0x4, fixed_abs, tag = 'smem constant byte address 0x4 - core index']
  #allocation1 [shape = 'u32[144,128]{1,0:T(1,128)}', space=vmem, size = 0x12000, scoped, tag = 'internal scratch']
  %s0 = inlined_call_operand.hbm [shape: f32[1,2048], index: 0, kind: input, shape index: {}]
  %s1 = inlined_call_operand.hbm [shape: f32[1,2048], index: 1, kind: output, shape index: {}]
  %s2 = sld [smem:[#allocation0]]
  $region18: #{tpu_custom_call.1} parent=0
    _
  %s4 = ssub.s32 1, %s2
  %s5 = scalar_select 0, %s4, %s2
  $region1: #{tpu_custom_call.1} parent=0
    #allocation2 [shape = 'u8[8192]{0}', space=vmem, size = 0x2000, scoped, tag = 'input window, operand 0, single buffered']
    #allocation3 [shape = 's32[1]{0}', space=sflag, size = 0x4, scoped, tag = 'scoped memory for tpu_custom_call.1']
    #allocation4 [shape = 's32[1]{0}', space=sflag, size = 0x4, scoped, tag = 'scoped memory for tpu_custom_call.1']
    #allocation5 [shape = 'u8[8192]{0}', space=vmem, size = 0x2000, scoped, tag = 'output window, operand 0, single buffered']
    %6 = vsyncpa [#allocation3], 0
    %7 = vsyncpa [#allocation4], 0
    // Predicated region
    $region2: #{tpu_custom_call.1} parent=1 // pred_check
      _
    $region3: #{tpu_custom_call.1} parent=1 // pred_check_branch
      %9 = sbr.rel (0) target = $region5
    $region4: #{tpu_custom_call.1} parent=1 // pred_region
      %s11 = ssub.s32 256, 256
      %12 = vsyncadd [#allocation3], %s11
      %s14 = sshll.u32 [#allocation2], 4
      %s15 = int_to_ptr.vmem [resolvable:$true] %s14
      %17 = dma.hbm_to_vmem [thread:$0]  %s0, 256, %s15, [#allocation3]
    $region5: #{tpu_custom_call.1} parent=1 // pred_fallthru
      _
    // Predicated region
    $region6: #{tpu_custom_call.1} parent=1 // pred_check
      _
    $region7: #{tpu_custom_call.1} parent=1 // pred_check_branch
      %19 = sbr.rel (0) target = $region9
    $region8: #{tpu_custom_call.1} parent=1 // pred_region
      %20 = dma.done [#allocation3], 256
    $region9: #{tpu_custom_call.1} parent=1 // pred_fallthru
      _
    %v21 = vld [vmem:[#allocation2] sm:$0xff]
    %v22 = vld [vmem:[#allocation2 + $0x8] sm:$0xff]
    %23 = vst [vmem:[#allocation5] sm:$0xff] %v21
    %24 = vst [vmem:[#allocation5 + $0x8] sm:$0xff] %v22
    // Predicated region
    $region10: #{tpu_custom_call.1} parent=1 // pred_check
      _
    $region11: #{tpu_custom_call.1} parent=1 // pred_check_branch
      %26 = sbr.rel (0) target = $region13
    $region12: #{tpu_custom_call.1} parent=1 // pred_region
      %s28 = ssub.s32 256, 256
      %29 = vsyncadd [#allocation4], %s28
      %s31 = sshll.u32 [#allocation5], 4
      %s32 = int_to_ptr.vmem [resolvable:$true] %s31
      %34 = dma.vmem_to_hbm [thread:$0]  %s32, 256, %s1, [#allocation4]
    $region13: #{tpu_custom_call.1} parent=1 // pred_fallthru
      _
    // Predicated region
    $region14: #{tpu_custom_call.1} parent=1 // pred_check
      _
    $region15: #{tpu_custom_call.1} parent=1 // pred_check_branch
      %36 = sbr.rel (0) target = $region17
    $region16: #{tpu_custom_call.1} parent=1 // pred_region
      %37 = dma.done [#allocation4], 256
    $region17: #{tpu_custom_call.1} parent=1 // pred_fallthru
      _
    %38 = vsyncpa [#allocation3], 1
    %39 = vsyncpa [#allocation4], 1

</llo_original>
